<compile_context>
chip_gen: v7x
topology: tpu7x:2x2x1
jax: 0.10.0
libtpu: 0.0.40
codegen_flags: <defaults>
</compile_context>

<pallas_src>
import numpy as np
import jax
import jax.numpy as jnp
from jax.experimental import pallas as pl
from jax.experimental.pallas import tpu as pltpu


# ----------------------------------------------------------------------------
# Static weight packing (runs once, outside the per-call path).
# ----------------------------------------------------------------------------
def pack_weight_slab(w1, b1, w2, b2):
    wslab = jnp.zeros((16, 128), jnp.float32)
    wslab = wslab.at[0:3, 0:15].set(w1)            # W1
    wslab = wslab.at[0:3, 16].set(b1)              # b1 column
    wslab = wslab.at[8:11, 0:2].set(w2[:, 3:6].T)  # W2h^T (rows 8..10)
    wslab = wslab.at[11:14, 0:2].set(w2[:, 0:3].T) # W2w^T (rows 11..13)
    wslab = wslab.at[14, 0:2].set(b2)              # b2 row
    return wslab


# ----------------------------------------------------------------------------
# Single-sample kernel: whole (SMEM scalars), weight slab (VMEM), x row (VMEM).
# ----------------------------------------------------------------------------
def fusion_kernel(whole_ref, w_ref, x_ref, out_ref):
    # ---- layer 1 (fc1 + relu): VPU broadcast-multiply + XLU lane reduce ----
    x5 = x_ref[0:1, 0:15]            # (1, 15)
    w1 = w_ref[0:3, 0:15]            # (3, 15)
    b1 = w_ref[0:3, 16:17]           # (3, 1)
    h = jnp.maximum(jnp.sum(x5 * w1, axis=-1, keepdims=True) + b1, 0.0)   # (3, 1)
    # TODO(synk): dropout layers are identity (eval mode); training-mode masking
    # is not reproduced here.

    # ---- layer 2 (fc_2): h contribution via sublane reduce over padded W2h^T ----
    w2h_t = w_ref[8:11, :]           # (3, 128): W2[:,3:6]^T in lanes 0:2, zeros elsewhere
    b2row = w_ref[14:15, :]          # (1, 128): b2 in lanes 0:2
    out_row = jnp.sum(h * w2h_t, axis=0, keepdims=True) + b2row           # (1, 128)

    # whole contribution: relu(whole_j) * W2[:, j]^T rows, as scalar-vector FMAs.
    # (relu over cat(whole, h): h is already >= 0, only `whole` needs the relu.)
    for j in range(3):
        wj = jnp.full((1, 1), whole_ref[j], dtype=jnp.float32)
        out_row = out_row + jnp.maximum(wj, 0.0) * w_ref[11 + j:12 + j, :]

    # Single lane-dense, unmasked store. Only lanes 0:2 carry the result.
    out_ref[...] = out_row


def make_fusion_forward(params):
    """Single-sample forward (matches the PyTorch module's forward exactly)."""
    w1 = jnp.asarray(params["w1"], jnp.float32)   # (3, 15)
    b1 = jnp.asarray(params["b1"], jnp.float32)   # (3,)
    w2 = jnp.asarray(params["w2"], jnp.float32)   # (2, 6)
    b2 = jnp.asarray(params["b2"], jnp.float32)   # (2,)
    wslab = pack_weight_slab(w1, b1, w2, b2)      # static: closed over -> constant-folded

    @jax.jit
    def forward(whole, l_eye, l_lips, nose, r_eye, r_lips):
        # One concat + one contiguous row update is the whole per-call dynamic path.
        x5 = jnp.concatenate([l_eye, l_lips, nose, r_eye, r_lips],
                             axis=0).astype(jnp.float32)              # (15,)
        xrow = jnp.zeros((1, 128), jnp.float32).at[0, 0:15].set(x5)   # (1, 128)

        out = pl.pallas_call(
            fusion_kernel,
            out_shape=jax.ShapeDtypeStruct((1, 128), jnp.float32),
            in_specs=[
                pl.BlockSpec(memory_space=pltpu.MemorySpace.SMEM),    # whole (3,)
                pl.BlockSpec(memory_space=pltpu.MemorySpace.VMEM),    # weight slab
                pl.BlockSpec(memory_space=pltpu.MemorySpace.VMEM),    # x row
            ],
            out_specs=pl.BlockSpec(memory_space=pltpu.MemorySpace.VMEM),
        )(whole.astype(jnp.float32), wslab, xrow)
        return out[0, 0:2]                                            # (2,)

    return forward


# ----------------------------------------------------------------------------
# Batched entry point: B samples along sublanes, grid over batch tiles.
# ----------------------------------------------------------------------------
def make_fusion_forward_batched(params, tile_b=128):
    w1 = jnp.asarray(params["w1"], jnp.float32)
    b1 = jnp.asarray(params["b1"], jnp.float32)
    w2 = jnp.asarray(params["w2"], jnp.float32)
    b2 = jnp.asarray(params["b2"], jnp.float32)
    wslab = pack_weight_slab(w1, b1, w2, b2)

    # Scalar parameters baked in as compile-time constants (static weights).
    b1_f = [float(v) for v in np.asarray(b1)]
    b2_f = [float(v) for v in np.asarray(b2)]
    w2_f = np.asarray(w2)  # (2, 6)

    def batched_kernel(w_ref, x_ref, out_ref):
        # x_ref: (tile_b, 18) -> cols 0:15 = x5, cols 15:18 = whole
        x5 = x_ref[:, 0:15]                                 # (TB, 15)
        wz = jnp.maximum(x_ref[:, 15:18], 0.0)              # (TB, 3)

        # layer 1: per output j, lane reduce over the 15 features (VPU + XLU).
        h = []
        for j in range(3):
            w1j = w_ref[j:j + 1, 0:15]                      # (1, 15)
            hj = jnp.sum(x5 * w1j, axis=-1, keepdims=True) + b1_f[j]
            h.append(jnp.maximum(hj, 0.0))                  # (TB, 1)

        # layer 2: z = [relu(whole); h], out[:, m] = sum_j z_j * W2[m, j] + b2[m]
        z = [wz[:, 0:1], wz[:, 1:2], wz[:, 2:3]] + h        # 6 x (TB, 1)
        outs = []
        for m in range(2):
            acc = z[0] * float(w2_f[m, 0])
            for j in range(1, 6):
                acc = acc + z[j] * float(w2_f[m, j])
            outs.append(acc + b2_f[m])                      # (TB, 1)
        out_ref[...] = jnp.concatenate(outs, axis=-1)       # (TB, 2)

    @jax.jit
    def forward(whole, l_eye, l_lips, nose, r_eye, r_lips):
        x = jnp.concatenate([l_eye, l_lips, nose, r_eye, r_lips, whole],
                            axis=1).astype(jnp.float32)     # (B, 18)
        b = x.shape[0]
        bp = ((b + tile_b - 1) // tile_b) * tile_b
        if bp != b:
            x = jnp.pad(x, ((0, bp - b), (0, 0)))

        out = pl.pallas_call(
            batched_kernel,
            out_shape=jax.ShapeDtypeStruct((bp, 2), jnp.float32),
            grid=(bp // tile_b,),
            in_specs=[
                pl.BlockSpec((16, 128), lambda i: (0, 0)),      # weight slab, resident
                pl.BlockSpec((tile_b, 18), lambda i: (i, 0)),   # input tile
            ],
            out_specs=pl.BlockSpec((tile_b, 2), lambda i: (i, 0)),
            compiler_params=pltpu.CompilerParams(
                dimension_semantics=("parallel",)),             # both TCs on v7x
        )(wslab, x)
        return out[:b]                                          # (B, 2)

    return forward


# ----------------------------------------------------------------------------
# Pure-JAX references (exact eval-mode PyTorch semantics).
# ----------------------------------------------------------------------------
def fusion_reference(whole, l_eye, l_lips, nose, r_eye, r_lips, params):
    x5 = jnp.concatenate([l_eye, l_lips, nose, r_eye, r_lips], axis=0)
    h = jnp.maximum(params["w1"] @ x5 + params["b1"], 0.0)
    z = jnp.maximum(jnp.concatenate([whole, h], axis=0), 0.0)
    return params["w2"] @ z + params["b2"]


if __name__ == "__main__":
    key = jax.random.PRNGKey(0)
    ks = jax.random.split(key, 16)

    # Deterministic params (torch default: U(-1/sqrt(fan_in), 1/sqrt(fan_in))).
    bnd1 = 1.0 / np.sqrt(15.0)
    bnd2 = 1.0 / np.sqrt(6.0)
    params = {
        "w1": jax.random.uniform(ks[0], (3, 15), jnp.float32, -bnd1, bnd1),
        "b1": jax.random.uniform(ks[1], (3,), jnp.float32, -bnd1, bnd1),
        "w2": jax.random.uniform(ks[2], (2, 6), jnp.float32, -bnd2, bnd2),
        "b2": jax.random.uniform(ks[3], (2,), jnp.float32, -bnd2, bnd2),
    }
    # bn1 (BatchNorm1d(3)) is unused in the forward pass -> not instantiated.

    # ---- single-sample (faithful to the module's forward signature) ----
    whole  = jax.random.normal(ks[4], (3,), jnp.float32)
    l_eye  = jax.random.normal(ks[5], (3,), jnp.float32)
    l_lips = jax.random.normal(ks[6], (3,), jnp.float32)
    nose   = jax.random.normal(ks[7], (3,), jnp.float32)
    r_eye  = jax.random.normal(ks[8], (3,), jnp.float32)
    r_lips = jax.random.normal(ks[9], (3,), jnp.float32)

    forward = make_fusion_forward(params)
    out = jax.block_until_ready(forward(whole, l_eye, l_lips, nose, r_eye, r_lips))
    ref = fusion_reference(whole, l_eye, l_lips, nose, r_eye, r_lips, params)
    np.testing.assert_allclose(np.asarray(out), np.asarray(ref), rtol=1e-5, atol=1e-5)

    # ---- batched path (samples along sublanes, parallel grid over tiles) ----
    B = 256
    whole_b  = jax.random.normal(ks[10], (B, 3), jnp.float32)
    l_eye_b  = jax.random.normal(ks[11], (B, 3), jnp.float32)
    l_lips_b = jax.random.normal(ks[12], (B, 3), jnp.float32)
    nose_b   = jax.random.normal(ks[13], (B, 3), jnp.float32)
    r_eye_b  = jax.random.normal(ks[14], (B, 3), jnp.float32)
    r_lips_b = jax.random.normal(ks[15], (B, 3), jnp.float32)

    forward_b = make_fusion_forward_batched(params, tile_b=128)
    out_b = jax.block_until_ready(
        forward_b(whole_b, l_eye_b, l_lips_b, nose_b, r_eye_b, r_lips_b))
    ref_b = jax.vmap(fusion_reference, in_axes=(0, 0, 0, 0, 0, 0, None))(
        whole_b, l_eye_b, l_lips_b, nose_b, r_eye_b, r_lips_b, params)
    np.testing.assert_allclose(np.asarray(out_b), np.asarray(ref_b), rtol=1e-5, atol=1e-5)

    print("KERNEL_OK")
</pallas_src>

<mosaic_0001>
module attributes {stable_mosaic.version = 11 : i64} {
  func.func @fusion_kernel(%arg0: memref<3xf32, #tpu.memory_space<smem>>, %arg1: memref<16x128xf32, #tpu.memory_space<vmem>>, %arg2: memref<1x128xf32, #tpu.memory_space<vmem>>, %arg3: memref<1x128xf32, #tpu.memory_space<vmem>>) attributes {dimension_semantics = [], scalar_prefetch = 0 : i64, scratch_operands = 0 : i64, tpu.core_type = #tpu.core_type<tc>} {
    %c0 = arith.constant 0 : index
    %c0_0 = arith.constant 0 : index
    %0 = vector.load %arg2[%c0, %c0_0] : memref<1x128xf32, #tpu.memory_space<vmem>>, vector<1x15xf32>
    %c0_1 = arith.constant 0 : index
    %c0_2 = arith.constant 0 : index
    %1 = vector.load %arg1[%c0_1, %c0_2] : memref<16x128xf32, #tpu.memory_space<vmem>>, vector<3x15xf32>
    %c0_3 = arith.constant 0 : index
    %c16 = arith.constant 16 : index
    %2 = vector.load %arg1[%c0_3, %c16] : memref<16x128xf32, #tpu.memory_space<vmem>>, vector<3x1xf32>
    %3 = vector.broadcast %0 : vector<1x15xf32> to vector<3x15xf32>
    %4 = arith.mulf %3, %1 : vector<3x15xf32>
    %cst = arith.constant dense<0.000000e+00> : vector<3xf32>
    %5 = vector.multi_reduction <add>, %4, %cst [1] : vector<3x15xf32> to vector<3xf32>
    %6 = vector.shape_cast %5 : vector<3xf32> to vector<3x1xf32>
    %7 = arith.addf %6, %2 : vector<3x1xf32>
    %cst_4 = arith.constant 0.000000e+00 : f32
    %8 = vector.broadcast %cst_4 : f32 to vector<3x1xf32>
    %9 = arith.maximumf %7, %8 : vector<3x1xf32>
    %c8 = arith.constant 8 : index
    %c0_5 = arith.constant 0 : index
    %10 = vector.load %arg1[%c8, %c0_5] : memref<16x128xf32, #tpu.memory_space<vmem>>, vector<3x128xf32>
    %c14 = arith.constant 14 : index
    %c0_6 = arith.constant 0 : index
    %11 = vector.load %arg1[%c14, %c0_6] : memref<16x128xf32, #tpu.memory_space<vmem>>, vector<1x128xf32>
    %12 = vector.broadcast %9 : vector<3x1xf32> to vector<3x128xf32>
    %13 = arith.mulf %12, %10 : vector<3x128xf32>
    %cst_7 = arith.constant dense<0.000000e+00> : vector<128xf32>
    %14 = vector.multi_reduction <add>, %13, %cst_7 [0] : vector<3x128xf32> to vector<128xf32>
    %15 = vector.shape_cast %14 : vector<128xf32> to vector<1x128xf32>
    %16 = arith.addf %15, %11 : vector<1x128xf32>
    %c0_8 = arith.constant 0 : index
    %17 = memref.load %arg0[%c0_8] : memref<3xf32, #tpu.memory_space<smem>>
    %18 = vector.broadcast %17 : f32 to vector<1x1xf32>
    %cst_9 = arith.constant 0.000000e+00 : f32
    %19 = vector.broadcast %cst_9 : f32 to vector<1x1xf32>
    %20 = arith.maximumf %18, %19 : vector<1x1xf32>
    %c11 = arith.constant 11 : index
    %c0_10 = arith.constant 0 : index
    %21 = vector.load %arg1[%c11, %c0_10] : memref<16x128xf32, #tpu.memory_space<vmem>>, vector<1x128xf32>
    %22 = vector.broadcast %20 : vector<1x1xf32> to vector<1x128xf32>
    %23 = arith.mulf %22, %21 : vector<1x128xf32>
    %24 = arith.addf %16, %23 : vector<1x128xf32>
    %c1 = arith.constant 1 : index
    %25 = memref.load %arg0[%c1] : memref<3xf32, #tpu.memory_space<smem>>
    %26 = vector.broadcast %25 : f32 to vector<1x1xf32>
    %cst_11 = arith.constant 0.000000e+00 : f32
    %27 = vector.broadcast %cst_11 : f32 to vector<1x1xf32>
    %28 = arith.maximumf %26, %27 : vector<1x1xf32>
    %c12 = arith.constant 12 : index
    %c0_12 = arith.constant 0 : index
    %29 = vector.load %arg1[%c12, %c0_12] : memref<16x128xf32, #tpu.memory_space<vmem>>, vector<1x128xf32>
    %30 = vector.broadcast %28 : vector<1x1xf32> to vector<1x128xf32>
    %31 = arith.mulf %30, %29 : vector<1x128xf32>
    %32 = arith.addf %24, %31 : vector<1x128xf32>
    %c2 = arith.constant 2 : index
    %33 = memref.load %arg0[%c2] : memref<3xf32, #tpu.memory_space<smem>>
    %34 = vector.broadcast %33 : f32 to vector<1x1xf32>
    %cst_13 = arith.constant 0.000000e+00 : f32
    %35 = vector.broadcast %cst_13 : f32 to vector<1x1xf32>
    %36 = arith.maximumf %34, %35 : vector<1x1xf32>
    %c13 = arith.constant 13 : index
    %c0_14 = arith.constant 0 : index
    %37 = vector.load %arg1[%c13, %c0_14] : memref<16x128xf32, #tpu.memory_space<vmem>>, vector<1x128xf32>
    %38 = vector.broadcast %36 : vector<1x1xf32> to vector<1x128xf32>
    %39 = arith.mulf %38, %37 : vector<1x128xf32>
    %40 = arith.addf %32, %39 : vector<1x128xf32>
    %c0_15 = arith.constant 0 : index
    %c0_16 = arith.constant 0 : index
    %41 = vector.load %arg3[%c0_15, %c0_16] : memref<1x128xf32, #tpu.memory_space<vmem>>, vector<1x128xf32>
    tpu.vector_store %arg3[%c0_15, %c0_16], %40 {strides = array<i32>} : memref<1x128xf32, #tpu.memory_space<vmem>>, vector<1x128xf32>,
    return
  }
}

</mosaic_0001>

<llo_original>
// kernel: forward.1
$region0: #{forward.1}
  #allocation0 [shape = 'u32[]', space=smem, size = 0x4, offset = 0x4, fixed_abs, tag = 'smem constant byte address 0x4 - core index']
  #allocation1 [shape = 'u32[144,128]{1,0:T(1,128)}', space=vmem, size = 0x12000, scoped, tag = 'internal scratch']
  %s0 = inlined_call_operand.vmem [shape: f32[3], index: 0, kind: input, shape index: {}]
  %s1 = inlined_call_operand.vmem [shape: f32[16,128], index: 1, kind: input, shape index: {}]
  %s2 = inlined_call_operand.vmem [shape: f32[1,128], index: 2, kind: input, shape index: {}]
  %s3 = inlined_call_operand.vmem [shape: f32[1,128], index: 3, kind: output, shape index: {}]
  %s4 = sld [smem:[#allocation0]]
  $region26: #{forward.1} parent=0
    _
  %s6 = ssub.s32 1, %s4
  %s7 = scalar_select 0, %s6, %s4
  $region1: #{forward.1} parent=0
    #allocation2 [shape = 'u8[512]{0}', space=smem, size = 0x200, scoped, tag = 'input window, operand 0, single buffered']
    #allocation3 [shape = 's32[1]{0}', space=sflag, size = 0x4, scoped, tag = 'scoped memory for forward.1']
    %8 = vsyncpa [#allocation3], 0
    // Predicated region
    $region2: #{forward.1} parent=1 // pred_check
      _
    $region3: #{forward.1} parent=1 // pred_check_branch
      %10 = sbr.rel (0) target = $region5
    $region4: #{forward.1} parent=1 // pred_region
      %s12 = ssub.s32 16, 16
      %13 = vsyncadd [#allocation3], %s12
      %s15 = sshll.u32 %s0, 4
      %s16 = int_to_ptr.vmem [resolvable:$true] %s15
      %18 = dma.vmem_to_smem %s16, 16, [#allocation2], [#allocation3]
    $region5: #{forward.1} parent=1 // pred_fallthru
      _
    // Predicated region
    $region6: #{forward.1} parent=1 // pred_check
      _
    $region7: #{forward.1} parent=1 // pred_check_branch
      %20 = sbr.rel (0) target = $region9
    $region8: #{forward.1} parent=1 // pred_region
      _
    $region9: #{forward.1} parent=1 // pred_fallthru
      _
    // Predicated region
    $region10: #{forward.1} parent=1 // pred_check
      _
    $region11: #{forward.1} parent=1 // pred_check_branch
      %22 = sbr.rel (0) target = $region13
    $region12: #{forward.1} parent=1 // pred_region
      _
    $region13: #{forward.1} parent=1 // pred_fallthru
      _
    // Predicated region
    $region14: #{forward.1} parent=1 // pred_check
      _
    $region15: #{forward.1} parent=1 // pred_check_branch
      %24 = sbr.rel (0) target = $region17
    $region16: #{forward.1} parent=1 // pred_region
      %25 = dma.done [#allocation3], 16
    $region17: #{forward.1} parent=1 // pred_fallthru
      _
    %26 = sfence
    %v27 = vld [vmem:[%s2] sm:$0x1]
    %v28 = vld [vmem:[%s1] sm:$0x7]
    %v30 = vlaneseq
    %v31 = vshrl.u32 %v30, 7
    %v32 = vsub.s32 0, %v31
    %v33 = vrot.slane %v27, %v32
    %v35 = vmul.f32 %v33, %v28
    %vm36 = vcmask 116736
    %v37 = vsel %vm36, %v35, 0.0
    %38 = vadd.xlane.f32.xlu0 %v37
    %v39 = vpop.xlane.xlu0 %38
    %v40 = vadd.f32 %v39, %v28
    %v41 = vmax.f32 %v40, 0.0
    %v42 = vld [vmem:[%s1 + $0x8] sm:$0x7]
    %v43 = vld [vmem:[%s1 + $0xe] sm:$0x1]
    %45 = vset.pattern.permute.xlu0 16
    %46 = vperm.xlu0 %45, %v41
    %v47 = vpop.permute.xlu0 %46
    %v49 = vmul.f32 %v47, %v42
    %vm50 = vcmask 1042432
    %v51 = vsel %vm50, %v49, 0.0
    %v52 = vrot.slane %v51, 4
    %v53 = vadd.f32 %v51, %v52
    %v54 = vrot.slane %v53, 2
    %v55 = vadd.f32 %v53, %v54
    %v56 = vrot.slane %v55, 1
    %v57 = vadd.f32 %v55, %v56
    %v58 = vadd.f32 %v57, %v43
    %s59 = sld [smem:[#allocation2]]
    %v60 = vstv %s59
    %v61 = vmax.f32 %v60, 0.0
    %v62 = vld [vmem:[%s1 + $0xb] sm:$0x1]
    %v63 = vmul.f32 %v61, %v62
    %v64 = vadd.f32 %v58, %v63
    %s65 = sld [smem:[#allocation2 + $0x1]]
    %v66 = vstv %s65
    %v67 = vmax.f32 %v66, 0.0
    %v68 = vld [vmem:[%s1 + $0xc] sm:$0x1]
    %v69 = vmul.f32 %v67, %v68
    %v70 = vadd.f32 %v64, %v69
    %s71 = sld [smem:[#allocation2 + $0x2]]
    %v72 = vstv %s71
    %v73 = vmax.f32 %v72, 0.0
    %v74 = vld [vmem:[%s1 + $0xd] sm:$0x1]
    %v75 = vmul.f32 %v73, %v74
    %v76 = vadd.f32 %v70, %v75
    %77 = vst [vmem:[%s3] sm:$0x1] %v76
    // Predicated region
    $region18: #{forward.1} parent=1 // pred_check
      _
    $region19: #{forward.1} parent=1 // pred_check_branch
      %79 = sbr.rel (0) target = $region21
    $region20: #{forward.1} parent=1 // pred_region
      _
    $region21: #{forward.1} parent=1 // pred_fallthru
      _
    // Predicated region
    $region22: #{forward.1} parent=1 // pred_check
      _
    $region23: #{forward.1} parent=1 // pred_check_branch
      %81 = sbr.rel (0) target = $region25
    $region24: #{forward.1} parent=1 // pred_region
      _
    $region25: #{forward.1} parent=1 // pred_fallthru
      _
    %82 = vsyncpa [#allocation3], 1

</llo_original>
